<compile_context>
chip_gen: v6e
topology: v6e:2x2x1
jax: 0.10.0
libtpu: 0.0.40
codegen_flags: <defaults>
</compile_context>

<pallas_src>
import functools

import jax
import jax.numpy as jnp
from jax.experimental import pallas as pl
from jax.experimental.pallas import tpu as pltpu


# ---------------------------------------------------------------------------
# Kernel
# ---------------------------------------------------------------------------
def _combined_kernel(x1_ref, x2_ref, x3_ref, w1_ref, w2_ref, w3_ref,
                     wc_ref, wo_ref, bias_ref, out_ref, *, H, C, O, OUT):
    """Fused forward: block-diag subnet layer -> combined layer -> output layer.

    x1_ref/x2_ref/x3_ref : (B_tile, i_k)  raw inputs (no concat / lane pad)
    w1_ref/w2_ref/w3_ref : (i_k, H) bf16  row-blocks of block-diag [W1|W2|W3]
    wc_ref               : (H, C)   bf16  fc_combined with subnet-BN folded in
    wo_ref               : (C, O)   bf16  fc_output with combined-BN folded in
    bias_ref             : (8, max(H,C,O)) f32
                           row 0 = subnet biases, row 1 = combined bias
                           (incl. BN shift), row 2 = output bias (incl. BN shift)
    out_ref              : (B_tile, OUT) f32
    """
    bf16 = jnp.bfloat16

    # subnet layer: three partial dots == one block-diagonal matmul; then ReLU.
    # (BN of the subnets is folded into wc / bias row 1.)
    h = jnp.dot(x1_ref[...].astype(bf16), w1_ref[...],
                preferred_element_type=jnp.float32)
    h = h + jnp.dot(x2_ref[...].astype(bf16), w2_ref[...],
                    preferred_element_type=jnp.float32)
    h = h + jnp.dot(x3_ref[...].astype(bf16), w3_ref[...],
                    preferred_element_type=jnp.float32)
    h = jnp.maximum(h + bias_ref[0:1, :H], 0.0)

    # combined layer: Linear -> ReLU   (combined BN folded into wo / bias row 2)
    c = jnp.dot(h.astype(bf16), wc_ref[...], preferred_element_type=jnp.float32)
    c = jnp.maximum(c + bias_ref[1:2, :C], 0.0)

    # output layer: Linear -> Dropout(identity, eval) -> Sigmoid
    o = jnp.dot(c.astype(bf16), wo_ref[...], preferred_element_type=jnp.float32)
    o = (o + bias_ref[2:3, :O])[:, :OUT]
    # sigmoid(o) == 0.5*tanh(0.5*o)+0.5  -> tanh runs on the (otherwise idle) EUP slot
    out_ref[...] = 0.5 * jnp.tanh(0.5 * o) + 0.5


# ---------------------------------------------------------------------------
# Wrapper
# ---------------------------------------------------------------------------
def _round_up(n, m):
    return ((n + m - 1) // m) * m


_SINGLE_BLOCK_MAX_B = 512   # gridless single-block path up to this many rows
_MAX_BATCH_TILE = 1024      # cap on per-grid-step batch tile


def combined_network_forward(x1, x2, x3, fused):
    """Run the fused Pallas kernel. `fused` comes from fuse_params()."""
    d = fused["dims"]
    B = x1.shape[0]
    OUT = d["out"]

    kernel = functools.partial(_combined_kernel,
                               H=d["H"], C=d["C"], O=d["O"], OUT=OUT)
    operands = (x1, x2, x3,
                fused["w1"], fused["w2"], fused["w3"],
                fused["w_comb"], fused["w_out"], fused["bias"])
    out_shape = jax.ShapeDtypeStruct((B, OUT), jnp.float32)

    flops = 2 * B * ((d["i1"] + d["i2"] + d["i3"]) * d["H"]
                     + d["H"] * d["C"] + d["C"] * d["O"])
    bytes_accessed = (x1.size * x1.dtype.itemsize
                      + x2.size * x2.dtype.itemsize
                      + x3.size * x3.dtype.itemsize
                      + 2 * (fused["w1"].size + fused["w2"].size
                             + fused["w3"].size + fused["w_comb"].size
                             + fused["w_out"].size)
                      + 4 * fused["bias"].size + 4 * B * OUT)
    cost = pl.CostEstimate(flops=flops, transcendentals=B * OUT,
                           bytes_accessed=bytes_accessed)

    if B <= _SINGLE_BLOCK_MAX_B:
        # no grid: every operand fully resident in VMEM; no batch padding needed
        vmem = pl.BlockSpec(memory_space=pltpu.MemorySpace.VMEM)
        return pl.pallas_call(
            kernel,
            out_shape=out_shape,
            in_specs=[vmem] * len(operands),
            out_specs=vmem,
            cost_estimate=cost,
        )(*operands)

    # batch-tiled "parallel" grid: tile chosen so there are always >= 2 tiles
    # (both v7x TensorCores get work); the last block is masked if B % tile != 0.
    tile = min(_MAX_BATCH_TILE, _round_up(pl.cdiv(B, 2), 128))
    nb = pl.cdiv(B, tile)

    def full(a):
        return pl.BlockSpec(a.shape, lambda i: (0, 0))

    return pl.pallas_call(
        kernel,
        out_shape=out_shape,
        grid=(nb,),
        in_specs=[
            pl.BlockSpec((tile, d["i1"]), lambda i: (i, 0)),
            pl.BlockSpec((tile, d["i2"]), lambda i: (i, 0)),
            pl.BlockSpec((tile, d["i3"]), lambda i: (i, 0)),
            full(fused["w1"]), full(fused["w2"]), full(fused["w3"]),
            full(fused["w_comb"]), full(fused["w_out"]), full(fused["bias"]),
        ],
        out_specs=pl.BlockSpec((tile, OUT), lambda i: (i, 0)),
        compiler_params=pltpu.CompilerParams(
            dimension_semantics=("parallel",)),
        cost_estimate=cost,
    )(*operands)


# ---------------------------------------------------------------------------
# Parameter construction (PyTorch-module-equivalent, eval mode)
# ---------------------------------------------------------------------------
def _linear_params(key, in_f, out_f):
    """PyTorch-style Linear init; weight returned as (in_f, out_f)."""
    kw, kb = jax.random.split(key)
    bound = 1.0 / jnp.sqrt(jnp.float32(in_f))
    w = jax.random.uniform(kw, (in_f, out_f), jnp.float32, -bound, bound)
    b = jax.random.uniform(kb, (1, out_f), jnp.float32, -bound, bound)
    return w, b


def _bn_scale_shift(key, num_f, eps=1e-5):
    """BatchNorm1d (eval mode, running stats) folded to per-feature scale/shift."""
    kg, kb, km, kv = jax.random.split(key, 4)
    gamma = 1.0 + 0.1 * jax.random.normal(kg, (1, num_f), jnp.float32)
    beta = 0.1 * jax.random.normal(kb, (1, num_f), jnp.float32)
    mean = 0.1 * jax.random.normal(km, (1, num_f), jnp.float32)
    var = 1.0 + 0.1 * jnp.abs(jax.random.normal(kv, (1, num_f), jnp.float32))
    scale = gamma / jnp.sqrt(var + eps)
    shift = beta - mean * scale
    return scale, shift


def make_params(key, input_sizes, subnet_hidden_sizes, combined_hidden_size,
                output_size):
    keys = jax.random.split(key, 9)
    h1, h2, h3 = subnet_hidden_sizes
    w1, b1 = _linear_params(keys[0], input_sizes[0], h1)
    s1, t1 = _bn_scale_shift(keys[1], h1)
    w2, b2 = _linear_params(keys[2], input_sizes[1], h2)
    s2, t2 = _bn_scale_shift(keys[3], h2)
    w3, b3 = _linear_params(keys[4], input_sizes[2], h3)
    s3, t3 = _bn_scale_shift(keys[5], h3)
    wc, bc = _linear_params(keys[6], h1 + h2 + h3, combined_hidden_size)
    sc, tc = _bn_scale_shift(keys[7], combined_hidden_size)
    wo, bo = _linear_params(keys[8], combined_hidden_size, output_size)
    return dict(w1=w1, b1=b1, s1=s1, t1=t1,
                w2=w2, b2=b2, s2=s2, t2=t2,
                w3=w3, b3=b3, s3=s3, t3=t3,
                wc=wc, bc=bc, sc=sc, tc=tc,
                wo=wo, bo=bo)


def fuse_params(p, input_sizes, subnet_hidden_sizes, combined_hidden_size,
                output_size):
    """Fold BN into adjacent weights, split the block-diag subnet weight into
    per-input row blocks, pad feature dims to 128 lanes, pack biases into one
    (8, 128) slab, and store all weights as bf16 (MXU inputs)."""
    i1, i2, i3 = input_sizes
    h1, h2, h3 = subnet_hidden_sizes
    hsum = h1 + h2 + h3
    H = _round_up(hsum, 128)
    C = _round_up(combined_hidden_size, 128)
    O = _round_up(output_size, 128)

    # --- per-input row-blocks of the block-diagonal subnet weight ---
    w1 = jnp.zeros((i1, H), jnp.float32).at[:, 0:h1].set(p["w1"])
    w2 = jnp.zeros((i2, H), jnp.float32).at[:, h1:h1 + h2].set(p["w2"])
    w3 = jnp.zeros((i3, H), jnp.float32).at[:, h1 + h2:hsum].set(p["w3"])
    b_sub = jnp.zeros((H,), jnp.float32)
    b_sub = b_sub.at[0:h1].set(p["b1"].reshape(-1))
    b_sub = b_sub.at[h1:h1 + h2].set(p["b2"].reshape(-1))
    b_sub = b_sub.at[h1 + h2:hsum].set(p["b3"].reshape(-1))

    # --- fc_combined with the subnet BN (scale/shift) folded in ---
    # (h*s + t) @ Wc == h @ (s[:,None]*Wc) + t @ Wc
    s_cat = jnp.concatenate([p["s1"].reshape(-1), p["s2"].reshape(-1),
                             p["s3"].reshape(-1)])
    t_cat = jnp.concatenate([p["t1"].reshape(-1), p["t2"].reshape(-1),
                             p["t3"].reshape(-1)])
    wc_fold = s_cat[:, None] * p["wc"]                       # (hsum, Cc)
    bc_fold = p["bc"].reshape(-1) + t_cat @ p["wc"]          # (Cc,)
    w_comb = jnp.zeros((H, C), jnp.float32).at[0:hsum, 0:combined_hidden_size].set(wc_fold)
    b_comb = jnp.zeros((C,), jnp.float32).at[0:combined_hidden_size].set(bc_fold)

    # --- fc_output with the combined BN folded in ---
    wo_fold = p["sc"].reshape(-1)[:, None] * p["wo"]         # (Cc, out)
    bo_fold = p["bo"].reshape(-1) + p["tc"].reshape(-1) @ p["wo"]
    w_out = jnp.zeros((C, O), jnp.float32).at[0:combined_hidden_size, 0:output_size].set(wo_fold)
    b_out = jnp.zeros((O,), jnp.float32).at[0:output_size].set(bo_fold)

    # --- pack all bias vectors into one (8, width) slab -> single DMA ---
    width = max(H, C, O)
    bias = jnp.zeros((8, width), jnp.float32)
    bias = bias.at[0, :H].set(b_sub)
    bias = bias.at[1, :C].set(b_comb)
    bias = bias.at[2, :O].set(b_out)

    bf16 = jnp.bfloat16
    return dict(w1=w1.astype(bf16), w2=w2.astype(bf16), w3=w3.astype(bf16),
                w_comb=w_comb.astype(bf16), w_out=w_out.astype(bf16), bias=bias,
                dims=dict(i1=i1, i2=i2, i3=i3, H=H, C=C, O=O, out=output_size))


# ---------------------------------------------------------------------------
# Plain-JAX reference of the module's (eval-mode) forward
# ---------------------------------------------------------------------------
def reference_forward(x1, x2, x3, p):
    h1 = jnp.maximum(x1 @ p["w1"] + p["b1"], 0.0) * p["s1"] + p["t1"]
    h2 = jnp.maximum(x2 @ p["w2"] + p["b2"], 0.0) * p["s2"] + p["t2"]
    h3 = jnp.maximum(x3 @ p["w3"] + p["b3"], 0.0) * p["s3"] + p["t3"]
    comb = jnp.concatenate([h1, h2, h3], axis=1)
    c = jnp.maximum(comb @ p["wc"] + p["bc"], 0.0) * p["sc"] + p["tc"]
    o = c @ p["wo"] + p["bo"]
    return jax.nn.sigmoid(o)


# ---------------------------------------------------------------------------
if __name__ == "__main__":
    input_sizes = (16, 32, 8)            # bandpower, timeseries, categorical
    subnet_hidden_sizes = (32, 32, 16)   # -> combined_subnet_size = 80
    combined_hidden_size = 32
    output_size = 2

    key = jax.random.PRNGKey(0)
    kp, kx = jax.random.split(key)
    params = make_params(kp, input_sizes, subnet_hidden_sizes,
                         combined_hidden_size, output_size)
    fused = fuse_params(params, input_sizes, subnet_hidden_sizes,
                        combined_hidden_size, output_size)

    # batch=4 / 160 exercise the gridless single-block path (incl. B not a
    # multiple of 8); batch=1100 exercises the batch-tiled "parallel" grid
    # path (tile=640 -> 2 tiles, last block masked).
    for batch in (4, 160, 1100):
        kx, k1, k2, k3 = jax.random.split(kx, 4)
        x1 = jax.random.normal(k1, (batch, input_sizes[0]), jnp.float32)
        x2 = jax.random.normal(k2, (batch, input_sizes[1]), jnp.float32)
        x3 = jax.random.normal(k3, (batch, input_sizes[2]), jnp.float32)

        out = jax.block_until_ready(combined_network_forward(x1, x2, x3, fused))
        ref = jax.block_until_ready(reference_forward(x1, x2, x3, params))

        assert out.shape == (batch, output_size)
        # tolerance covers bf16 MXU operands (same rounding as the TPU
        # default-precision f32 matmul) plus the exact-in-real-arithmetic
        # BN-fold reassociation
        max_err = jnp.max(jnp.abs(out - ref))
        assert jnp.allclose(out, ref, atol=3e-3, rtol=3e-3), \
            f"mismatch vs JAX reference (batch={batch}, max_err={max_err})"

    print("KERNEL_OK")
</pallas_src>

<mosaic_0001>
module attributes {stable_mosaic.version = 11 : i64} {
  func.func @_combined_kernel(%arg0: memref<4x16xf32, #tpu.memory_space<vmem>>, %arg1: memref<4x32xf32, #tpu.memory_space<vmem>>, %arg2: memref<4x8xf32, #tpu.memory_space<vmem>>, %arg3: memref<16x128xbf16, #tpu.memory_space<vmem>>, %arg4: memref<32x128xbf16, #tpu.memory_space<vmem>>, %arg5: memref<8x128xbf16, #tpu.memory_space<vmem>>, %arg6: memref<128x128xbf16, #tpu.memory_space<vmem>>, %arg7: memref<128x128xbf16, #tpu.memory_space<vmem>>, %arg8: memref<8x128xf32, #tpu.memory_space<vmem>>, %arg9: memref<4x2xf32, #tpu.memory_space<vmem>>) attributes {dimension_semantics = [], scalar_prefetch = 0 : i64, scratch_operands = 0 : i64, tpu.core_type = #tpu.core_type<tc>} {
    %c0 = arith.constant 0 : index
    %c0_0 = arith.constant 0 : index
    %0 = vector.load %arg0[%c0, %c0_0] : memref<4x16xf32, #tpu.memory_space<vmem>>, vector<4x16xf32>
    %1 = arith.truncf %0 : vector<4x16xf32> to vector<4x16xbf16>
    %c0_1 = arith.constant 0 : index
    %c0_2 = arith.constant 0 : index
    %2 = vector.load %arg3[%c0_1, %c0_2] : memref<16x128xbf16, #tpu.memory_space<vmem>>, vector<16x128xbf16>
    %cst = arith.constant dense<0.000000e+00> : vector<4x128xf32>
    %3 = tpu.matmul %1, %2, %cst {dimension_numbers = #tpu.dot_dimension_numbers<[1], [0], [0], [1], [0, 0, 1, 1], [], []>} : vector<4x16xbf16>, vector<16x128xbf16>, vector<4x128xf32> -> vector<4x128xf32>
    %c0_3 = arith.constant 0 : index
    %c0_4 = arith.constant 0 : index
    %4 = vector.load %arg1[%c0_3, %c0_4] : memref<4x32xf32, #tpu.memory_space<vmem>>, vector<4x32xf32>
    %5 = arith.truncf %4 : vector<4x32xf32> to vector<4x32xbf16>
    %c0_5 = arith.constant 0 : index
    %c0_6 = arith.constant 0 : index
    %6 = vector.load %arg4[%c0_5, %c0_6] : memref<32x128xbf16, #tpu.memory_space<vmem>>, vector<32x128xbf16>
    %cst_7 = arith.constant dense<0.000000e+00> : vector<4x128xf32>
    %7 = tpu.matmul %5, %6, %cst_7 {dimension_numbers = #tpu.dot_dimension_numbers<[1], [0], [0], [1], [0, 0, 1, 1], [], []>} : vector<4x32xbf16>, vector<32x128xbf16>, vector<4x128xf32> -> vector<4x128xf32>
    %8 = arith.addf %3, %7 : vector<4x128xf32>
    %c0_8 = arith.constant 0 : index
    %c0_9 = arith.constant 0 : index
    %9 = vector.load %arg2[%c0_8, %c0_9] : memref<4x8xf32, #tpu.memory_space<vmem>>, vector<4x8xf32>
    %10 = arith.truncf %9 : vector<4x8xf32> to vector<4x8xbf16>
    %c0_10 = arith.constant 0 : index
    %c0_11 = arith.constant 0 : index
    %11 = vector.load %arg5[%c0_10, %c0_11] : memref<8x128xbf16, #tpu.memory_space<vmem>>, vector<8x128xbf16>
    %cst_12 = arith.constant dense<0.000000e+00> : vector<4x128xf32>
    %12 = tpu.matmul %10, %11, %cst_12 {dimension_numbers = #tpu.dot_dimension_numbers<[1], [0], [0], [1], [0, 0, 1, 1], [], []>} : vector<4x8xbf16>, vector<8x128xbf16>, vector<4x128xf32> -> vector<4x128xf32>
    %13 = arith.addf %8, %12 : vector<4x128xf32>
    %c0_13 = arith.constant 0 : index
    %c0_14 = arith.constant 0 : index
    %14 = vector.load %arg8[%c0_13, %c0_14] : memref<8x128xf32, #tpu.memory_space<vmem>>, vector<1x128xf32>
    %15 = vector.broadcast %14 : vector<1x128xf32> to vector<4x128xf32>
    %16 = arith.addf %13, %15 : vector<4x128xf32>
    %cst_15 = arith.constant 0.000000e+00 : f32
    %17 = vector.broadcast %cst_15 : f32 to vector<4x128xf32>
    %18 = arith.maximumf %16, %17 : vector<4x128xf32>
    %19 = arith.truncf %18 : vector<4x128xf32> to vector<4x128xbf16>
    %c0_16 = arith.constant 0 : index
    %c0_17 = arith.constant 0 : index
    %20 = vector.load %arg6[%c0_16, %c0_17] : memref<128x128xbf16, #tpu.memory_space<vmem>>, vector<128x128xbf16>
    %cst_18 = arith.constant dense<0.000000e+00> : vector<4x128xf32>
    %21 = tpu.matmul %19, %20, %cst_18 {dimension_numbers = #tpu.dot_dimension_numbers<[1], [0], [0], [1], [0, 0, 1, 1], [], []>} : vector<4x128xbf16>, vector<128x128xbf16>, vector<4x128xf32> -> vector<4x128xf32>
    %c1 = arith.constant 1 : index
    %c0_19 = arith.constant 0 : index
    %22 = vector.load %arg8[%c1, %c0_19] : memref<8x128xf32, #tpu.memory_space<vmem>>, vector<1x128xf32>
    %23 = vector.broadcast %22 : vector<1x128xf32> to vector<4x128xf32>
    %24 = arith.addf %21, %23 : vector<4x128xf32>
    %cst_20 = arith.constant 0.000000e+00 : f32
    %25 = vector.broadcast %cst_20 : f32 to vector<4x128xf32>
    %26 = arith.maximumf %24, %25 : vector<4x128xf32>
    %27 = arith.truncf %26 : vector<4x128xf32> to vector<4x128xbf16>
    %c0_21 = arith.constant 0 : index
    %c0_22 = arith.constant 0 : index
    %28 = vector.load %arg7[%c0_21, %c0_22] : memref<128x128xbf16, #tpu.memory_space<vmem>>, vector<128x128xbf16>
    %cst_23 = arith.constant dense<0.000000e+00> : vector<4x128xf32>
    %29 = tpu.matmul %27, %28, %cst_23 {dimension_numbers = #tpu.dot_dimension_numbers<[1], [0], [0], [1], [0, 0, 1, 1], [], []>} : vector<4x128xbf16>, vector<128x128xbf16>, vector<4x128xf32> -> vector<4x128xf32>
    %c2 = arith.constant 2 : index
    %c0_24 = arith.constant 0 : index
    %30 = vector.load %arg8[%c2, %c0_24] : memref<8x128xf32, #tpu.memory_space<vmem>>, vector<1x128xf32>
    %31 = vector.broadcast %30 : vector<1x128xf32> to vector<4x128xf32>
    %32 = arith.addf %29, %31 : vector<4x128xf32>
    %33 = vector.extract_strided_slice %32 {offsets = [0, 0], sizes = [4, 2], strides = [1, 1]} : vector<4x128xf32> to vector<4x2xf32>
    %cst_25 = arith.constant 5.000000e-01 : f32
    %34 = vector.broadcast %cst_25 : f32 to vector<4x2xf32>
    %35 = arith.mulf %34, %33 : vector<4x2xf32>
    %36 = math.tanh %35 : vector<4x2xf32>
    %cst_26 = arith.constant 5.000000e-01 : f32
    %37 = vector.broadcast %cst_26 : f32 to vector<4x2xf32>
    %38 = arith.mulf %37, %36 : vector<4x2xf32>
    %cst_27 = arith.constant 5.000000e-01 : f32
    %39 = vector.broadcast %cst_27 : f32 to vector<4x2xf32>
    %40 = arith.addf %38, %39 : vector<4x2xf32>
    %c0_28 = arith.constant 0 : index
    %c0_29 = arith.constant 0 : index
    %41 = vector.load %arg9[%c0_28, %c0_29] : memref<4x2xf32, #tpu.memory_space<vmem>>, vector<4x2xf32>
    tpu.vector_store %arg9[%c0_28, %c0_29], %40 {strides = array<i32>} : memref<4x2xf32, #tpu.memory_space<vmem>>, vector<4x2xf32>,
    return
  }
}

</mosaic_0001>

<llo_original>
// kernel: tpu_custom_call.1
$region0: #{tpu_custom_call.1}
  #allocation0 [shape = 'u32[]', space=smem, size = 0x4, offset = 0x4, fixed_abs, tag = 'smem constant byte address 0x4 - core index']
  #allocation1 [shape = 'u32[144,128]{1,0:T(1,128)}', space=vmem, size = 0x12000, scoped, tag = 'internal scratch']
  %s0 = inlined_call_operand.hbm [shape: f32[4,16], index: 0, kind: input, shape index: {}]
  %s1 = inlined_call_operand.hbm [shape: f32[4,32], index: 1, kind: input, shape index: {}]
  %s2 = inlined_call_operand.hbm [shape: f32[4,8], index: 2, kind: input, shape index: {}]
  %s3 = inlined_call_operand.hbm [shape: bf16[16,128], index: 3, kind: input, shape index: {}]
  %s4 = inlined_call_operand.hbm [shape: bf16[32,128], index: 4, kind: input, shape index: {}]
  %s5 = inlined_call_operand.vmem [shape: bf16[8,128], index: 5, kind: input, shape index: {}]
  %s6 = inlined_call_operand.hbm [shape: bf16[128,128], index: 6, kind: input, shape index: {}]
  %s7 = inlined_call_operand.hbm [shape: bf16[128,128], index: 7, kind: input, shape index: {}]
  %s8 = inlined_call_operand.vmem [shape: f32[8,128], index: 8, kind: input, shape index: {}]
  %s9 = inlined_call_operand.vmem [shape: f32[4,2], index: 9, kind: output, shape index: {}]
  %s10 = sld [smem:[#allocation0]]
  $region74: #{tpu_custom_call.1} parent=0
    _
  %s12 = ssub.s32 1, %s10
  %s13 = scalar_select 0, %s12, %s10
  $region1: #{tpu_custom_call.1} parent=0
    #allocation2 [shape = 'u8[2048]{0}', space=vmem, size = 0x800, scoped, tag = 'input window, operand 0, single buffered']
    #allocation3 [shape = 's32[1]{0}', space=sflag, size = 0x4, scoped, tag = 'scoped memory for tpu_custom_call.1']
    #allocation4 [shape = 'u8[2048]{0}', space=vmem, size = 0x800, scoped, tag = 'input window, operand 1, single buffered']
    #allocation5 [shape = 's32[1]{0}', space=sflag, size = 0x4, scoped, tag = 'scoped memory for tpu_custom_call.1']
    #allocation6 [shape = 'u8[2048]{0}', space=vmem, size = 0x800, scoped, tag = 'input window, operand 2, single buffered']
    #allocation7 [shape = 'u8[4096]{0}', space=vmem, size = 0x1000, scoped, tag = 'input window, operand 3, single buffered']
    #allocation8 [shape = 's32[1]{0}', space=sflag, size = 0x4, scoped, tag = 'scoped memory for tpu_custom_call.1']
    #allocation9 [shape = 'u8[8192]{0}', space=vmem, size = 0x2000, scoped, tag = 'input window, operand 4, single buffered']
    #allocation10 [shape = 'u8[32768]{0}', space=vmem, size = 0x8000, scoped, tag = 'input window, operand 6, single buffered']
    #allocation11 [shape = 's32[1]{0}', space=sflag, size = 0x4, scoped, tag = 'scoped memory for tpu_custom_call.1']
    #allocation12 [shape = 'u8[32768]{0}', space=vmem, size = 0x8000, scoped, tag = 'input window, operand 7, single buffered']
    %14 = vsyncpa [#allocation3], 0
    %15 = vsyncpa [#allocation5], 0
    %16 = vsyncpa [#allocation8], 0
    %17 = vsyncpa [#allocation11], 0
    // Predicated region
    $region2: #{tpu_custom_call.1} parent=1 // pred_check
      _
    $region3: #{tpu_custom_call.1} parent=1 // pred_check_branch
      %19 = sbr.rel (0) target = $region5
    $region4: #{tpu_custom_call.1} parent=1 // pred_region
      %s21 = ssub.s32 64, 64
      %22 = vsyncadd [#allocation3], %s21
      %s24 = sshll.u32 [#allocation2], 4
      %s25 = int_to_ptr.vmem [resolvable:$true] %s24
      %27 = dma.hbm_to_vmem [thread:$0]  %s0, 64, %s25, [#allocation3]
    $region5: #{tpu_custom_call.1} parent=1 // pred_fallthru
      _
    // Predicated region
    $region6: #{tpu_custom_call.1} parent=1 // pred_check
      _
    $region7: #{tpu_custom_call.1} parent=1 // pred_check_branch
      %29 = sbr.rel (0) target = $region9
    $region8: #{tpu_custom_call.1} parent=1 // pred_region
      %s31 = ssub.s32 64, 64
      %32 = vsyncadd [#allocation5], %s31
      %s34 = sshll.u32 [#allocation4], 4
      %s35 = int_to_ptr.vmem [resolvable:$true] %s34
      %37 = dma.hbm_to_vmem [thread:$0]  %s1, 64, %s35, [#allocation5]
    $region9: #{tpu_custom_call.1} parent=1 // pred_fallthru
      _
    // Predicated region
    $region10: #{tpu_custom_call.1} parent=1 // pred_check
      _
    $region11: #{tpu_custom_call.1} parent=1 // pred_check_branch
      %39 = sbr.rel (0) target = $region13
    $region12: #{tpu_custom_call.1} parent=1 // pred_region
      %s41 = ssub.s32 64, 64
      %42 = vsyncadd [#allocation5], %s41
      %s44 = sshll.u32 [#allocation6], 4
      %s45 = int_to_ptr.vmem [resolvable:$true] %s44
      %47 = dma.hbm_to_vmem [thread:$0]  %s2, 64, %s45, [#allocation5]
    $region13: #{tpu_custom_call.1} parent=1 // pred_fallthru
      _
    // Predicated region
    $region14: #{tpu_custom_call.1} parent=1 // pred_check
      _
    $region15: #{tpu_custom_call.1} parent=1 // pred_check_branch
      %49 = sbr.rel (0) target = $region17
    $region16: #{tpu_custom_call.1} parent=1 // pred_region
      %s51 = ssub.s32 128, 128
      %52 = vsyncadd [#allocation8], %s51
      %s53 = sshll.u32 [#allocation7], 4
      %s54 = int_to_ptr.vmem [resolvable:$true] %s53
      %59 = dma.hbm_to_vmem [thread:$0]  %s3, 128, %s54, [#allocation8], 64, 64, 4
    $region17: #{tpu_custom_call.1} parent=1 // pred_fallthru
      _
    // Predicated region
    $region18: #{tpu_custom_call.1} parent=1 // pred_check
      _
    $region19: #{tpu_custom_call.1} parent=1 // pred_check_branch
      %61 = sbr.rel (0) target = $region21
    $region20: #{tpu_custom_call.1} parent=1 // pred_region
      %s63 = ssub.s32 256, 256
      %64 = vsyncadd [#allocation8], %s63
      %s65 = sshll.u32 [#allocation9], 4
      %s66 = int_to_ptr.vmem [resolvable:$true] %s65
      %71 = dma.hbm_to_vmem [thread:$0]  %s4, 256, %s66, [#allocation8], 64, 64, 4
    $region21: #{tpu_custom_call.1} parent=1 // pred_fallthru
      _
    // Predicated region
    $region22: #{tpu_custom_call.1} parent=1 // pred_check
      _
    $region23: #{tpu_custom_call.1} parent=1 // pred_check_branch
      %73 = sbr.rel (0) target = $region25
    $region24: #{tpu_custom_call.1} parent=1 // pred_region
      _
    $region25: #{tpu_custom_call.1} parent=1 // pred_fallthru
      _
    // Predicated region
    $region26: #{tpu_custom_call.1} parent=1 // pred_check
      _
    $region27: #{tpu_custom_call.1} parent=1 // pred_check_branch
      %75 = sbr.rel (0) target = $region29
    $region28: #{tpu_custom_call.1} parent=1 // pred_region
      %s77 = ssub.s32 1024, 1024
      %78 = vsyncadd [#allocation11], %s77
      %s79 = sshll.u32 [#allocation10], 4
      %s80 = int_to_ptr.vmem [resolvable:$true] %s79
      %85 = dma.hbm_to_vmem [thread:$0]  %s6, 1024, %s80, [#allocation11], 64, 64, 4
    $region29: #{tpu_custom_call.1} parent=1 // pred_fallthru
      _
    // Predicated region
    $region30: #{tpu_custom_call.1} parent=1 // pred_check
      _
    $region31: #{tpu_custom_call.1} parent=1 // pred_check_branch
      %87 = sbr.rel (0) target = $region33
    $region32: #{tpu_custom_call.1} parent=1 // pred_region
      %s89 = ssub.s32 1024, 1024
      %90 = vsyncadd [#allocation11], %s89
      %s91 = sshll.u32 [#allocation12], 4
      %s92 = int_to_ptr.vmem [resolvable:$true] %s91
      %97 = dma.hbm_to_vmem [thread:$0]  %s7, 1024, %s92, [#allocation11], 64, 64, 4
    $region33: #{tpu_custom_call.1} parent=1 // pred_fallthru
      _
    // Predicated region
    $region34: #{tpu_custom_call.1} parent=1 // pred_check
      _
    $region35: #{tpu_custom_call.1} parent=1 // pred_check_branch
      %99 = sbr.rel (0) target = $region37
    $region36: #{tpu_custom_call.1} parent=1 // pred_region
      _
    $region37: #{tpu_custom_call.1} parent=1 // pred_fallthru
      _
    // Predicated region
    $region38: #{tpu_custom_call.1} parent=1 // pred_check
      _
    $region39: #{tpu_custom_call.1} parent=1 // pred_check_branch
      %101 = sbr.rel (0) target = $region41
    $region40: #{tpu_custom_call.1} parent=1 // pred_region
      %102 = dma.done [#allocation3], 64
    $region41: #{tpu_custom_call.1} parent=1 // pred_fallthru
      _
    // Predicated region
    $region42: #{tpu_custom_call.1} parent=1 // pred_check
      _
    $region43: #{tpu_custom_call.1} parent=1 // pred_check_branch
      %104 = sbr.rel (0) target = $region45
    $region44: #{tpu_custom_call.1} parent=1 // pred_region
      %105 = dma.done [#allocation5], 64
    $region45: #{tpu_custom_call.1} parent=1 // pred_fallthru
      _
    // Predicated region
    $region46: #{tpu_custom_call.1} parent=1 // pred_check
      _
    $region47: #{tpu_custom_call.1} parent=1 // pred_check_branch
      %107 = sbr.rel (0) target = $region49
    $region48: #{tpu_custom_call.1} parent=1 // pred_region
      %108 = dma.done [#allocation5], 64
    $region49: #{tpu_custom_call.1} parent=1 // pred_fallthru
      _
    // Predicated region
    $region50: #{tpu_custom_call.1} parent=1 // pred_check
      _
    $region51: #{tpu_custom_call.1} parent=1 // pred_check_branch
      %110 = sbr.rel (0) target = $region53
    $region52: #{tpu_custom_call.1} parent=1 // pred_region
      %111 = dma.done [#allocation8], 128
    $region53: #{tpu_custom_call.1} parent=1 // pred_fallthru
      _
    // Predicated region
    $region54: #{tpu_custom_call.1} parent=1 // pred_check
      _
    $region55: #{tpu_custom_call.1} parent=1 // pred_check_branch
      %113 = sbr.rel (0) target = $region57
    $region56: #{tpu_custom_call.1} parent=1 // pred_region
      %114 = dma.done [#allocation8], 256
    $region57: #{tpu_custom_call.1} parent=1 // pred_fallthru
      _
    // Predicated region
    $region58: #{tpu_custom_call.1} parent=1 // pred_check
      _
    $region59: #{tpu_custom_call.1} parent=1 // pred_check_branch
      %116 = sbr.rel (0) target = $region61
    $region60: #{tpu_custom_call.1} parent=1 // pred_region
      %117 = dma.done [#allocation11], 1024
    $region61: #{tpu_custom_call.1} parent=1 // pred_fallthru
      _
    // Predicated region
    $region62: #{tpu_custom_call.1} parent=1 // pred_check
      _
    $region63: #{tpu_custom_call.1} parent=1 // pred_check_branch
      %119 = sbr.rel (0) target = $region65
    $region64: #{tpu_custom_call.1} parent=1 // pred_region
      %120 = dma.done [#allocation11], 1024
    $region65: #{tpu_custom_call.1} parent=1 // pred_fallthru
      _
    %v122 = vld [vmem:[#allocation2] sm:$0xf]
    %v123 = vpack.c.bf16 %v122, %v122
    %v124 = vld [vmem:[#allocation7] sm:$0xf]
    %v125 = vld [vmem:[#allocation7 + $0x4] sm:$0xf]
    %v126 = vld [vmem:[#allocation4] sm:$0xf]
    %v127 = vpack.c.bf16 %v126, %v126
    %v128 = vld [vmem:[#allocation9] sm:$0xf]
    %v129 = vld [vmem:[#allocation9 + $0x4] sm:$0xf]
    %v130 = vld [vmem:[#allocation9 + $0x8] sm:$0xf]
    %v131 = vld [vmem:[#allocation9 + $0xc] sm:$0xf]
    %v136 = vunpack.c.l.b16 %v128
    %v137 = vunpack.c.l.b16 %v129
    %v138 = vunpack.c.l.b16 %v130
    %v139 = vunpack.c.l.b16 %v131
    %v140 = vpack.c.b16 %v137, %v136
    %v141 = vpack.c.b16 %v139, %v138
    %vm144 = vcmask 261120
    %v146 = vsel %vm144, %v127, 0
    %148 = vmatprep.subr.bf16.mxu0 0
    %149 = vmatpush1.bf16.msra.mxu0 0
    %150 = vmatprep.subr.bf16.mxu0 0
    %151 = vmatpush1.bf16.msra.mxu0 0
    %152 = vmatprep.subr.bf16.mxu0 0
    %153 = vmatpush1.bf16.msra.mxu0 0
    %154 = vmatprep.subr.bf16.mxu0 0
    %155 = vmatpush1.bf16.msra.mxu0 0
    %156 = vmatprep.subr.bf16.mxu0 0
    %157 = vmatpush1.bf16.msra.mxu0 0
    %158 = vmatprep.subr.bf16.mxu0 0
    %159 = vmatpush1.bf16.msra.mxu0 0
    %160 = vmatprep.subr.bf16.mxu0 0
    %161 = vmatpush1.bf16.msra.mxu0 %v141
    %162 = vmatprep.subr.bf16.mxu0 0
    %163 = vmatpush1.bf16.msra.mxu0 %v140
    %164 = vmatprep.subr.bf16.mxu0 0
    %165 = vmatpush2.bf16.msra.mxu0 0
    %166 = vmatprep.subr.bf16.mxu0 0
    %167 = vmatpush2.bf16.msra.mxu0 0
    %168 = vmatprep.subr.bf16.mxu0 0
    %169 = vmatpush2.bf16.msra.mxu0 0
    %170 = vmatprep.subr.bf16.mxu0 0
    %171 = vmatpush2.bf16.msra.mxu0 0
    %172 = vmatprep.subr.bf16.mxu0 0
    %173 = vmatpush2.bf16.msra.mxu0 0
    %174 = vmatprep.subr.bf16.mxu0 0
    %175 = vmatpush2.bf16.msra.mxu0 0
    %176 = vmatprep.subr.bf16.mxu0 0
    %177 = vmatpush2.bf16.msra.mxu0 0
    %178 = vmatprep.subr.bf16.mxu0 0
    %179 = vmatpush2.bf16.msra.mxu0 0
    %180 = vmatprep.mubr.bf16.mxu0 0
    %181 = vmatmul.mubr.bf16.gmra.mxu0 %v146
    %v182 = vpop.f32.mrf.mxu0
    %v183 = vadd.f32 0.0, %v182
    %v184 = vpop.f32.mrf.mxu0
    %v185 = vpop.f32.mrf.mxu0
    %v186 = vpop.f32.mrf.mxu0
    %187 = vdwg.mxu0
    %v190 = vunpack.c.l.b16 %v124
    %v191 = vunpack.c.l.b16 %v125
    %v192 = vpack.c.b16 %v191, %v190
    %vm194 = vcmask 130048
    %v196 = vsel %vm194, %v123, 0
    %198 = vmatprep.subr.bf16.mxu0 0
    %199 = vmatpush1.bf16.msra.mxu0 0
    %200 = vmatprep.subr.bf16.mxu0 0
    %201 = vmatpush1.bf16.msra.mxu0 0
    %202 = vmatprep.subr.bf16.mxu0 0
    %203 = vmatpush1.bf16.msra.mxu0 0
    %204 = vmatprep.subr.bf16.mxu0 0
    %205 = vmatpush1.bf16.msra.mxu0 0
    %206 = vmatprep.subr.bf16.mxu0 0
    %207 = vmatpush1.bf16.msra.mxu0 0
    %208 = vmatprep.subr.bf16.mxu0 0
    %209 = vmatpush1.bf16.msra.mxu0 0
    %210 = vmatprep.subr.bf16.mxu0 0
    %211 = vmatpush1.bf16.msra.mxu0 0
    %212 = vmatprep.subr.bf16.mxu0 0
    %213 = vmatpush1.bf16.msra.mxu0 %v192
    %214 = vmatprep.subr.bf16.mxu0 0
    %215 = vmatpush2.bf16.msra.mxu0 0
    %216 = vmatprep.subr.bf16.mxu0 0
    %217 = vmatpush2.bf16.msra.mxu0 0
    %218 = vmatprep.subr.bf16.mxu0 0
    %219 = vmatpush2.bf16.msra.mxu0 0
    %220 = vmatprep.subr.bf16.mxu0 0
    %221 = vmatpush2.bf16.msra.mxu0 0
    %222 = vmatprep.subr.bf16.mxu0 0
    %223 = vmatpush2.bf16.msra.mxu0 0
    %224 = vmatprep.subr.bf16.mxu0 0
    %225 = vmatpush2.bf16.msra.mxu0 0
    %226 = vmatprep.subr.bf16.mxu0 0
    %227 = vmatpush2.bf16.msra.mxu0 0
    %228 = vmatprep.subr.bf16.mxu0 0
    %229 = vmatpush2.bf16.msra.mxu0 0
    %230 = vmatprep.mubr.bf16.mxu0 0
    %231 = vmatmul.mubr.bf16.gmra.mxu0 %v196
    %v232 = vpop.f32.mrf.mxu0
    %v233 = vadd.f32 %v183, %v232
    %v234 = vpop.f32.mrf.mxu0
    %v235 = vpop.f32.mrf.mxu0
    %v236 = vpop.f32.mrf.mxu0
    %237 = vdwg.mxu0
    %v238 = vld [vmem:[#allocation6] sm:$0xf]
    %v239 = vpack.c.bf16 %v238, %v238
    %v240 = vld [vmem:[%s5] sm:$0xf]
    %vm241 = vcmask 64512
    %v243 = vsel %vm241, %v239, 0
    %vm245 = vcmask 1043456
    %v247 = vsel %vm245, %v240, 0
    %249 = vmatprep.subr.bf16.mxu0 0
    %250 = vmatpush1.bf16.msra.mxu0 0
    %251 = vmatprep.subr.bf16.mxu0 0
    %252 = vmatpush1.bf16.msra.mxu0 0
    %253 = vmatprep.subr.bf16.mxu0 0
    %254 = vmatpush1.bf16.msra.mxu0 0
    %255 = vmatprep.subr.bf16.mxu0 0
    %256 = vmatpush1.bf16.msra.mxu0 0
    %257 = vmatprep.subr.bf16.mxu0 0
    %258 = vmatpush1.bf16.msra.mxu0 0
    %259 = vmatprep.subr.bf16.mxu0 0
    %260 = vmatpush1.bf16.msra.mxu0 0
    %261 = vmatprep.subr.bf16.mxu0 0
    %262 = vmatpush1.bf16.msra.mxu0 0
    %263 = vmatprep.subr.bf16.mxu0 0
    %264 = vmatpush1.bf16.msra.mxu0 %v247
    %265 = vmatprep.subr.bf16.mxu0 0
    %266 = vmatpush2.bf16.msra.mxu0 0
    %267 = vmatprep.subr.bf16.mxu0 0
    %268 = vmatpush2.bf16.msra.mxu0 0
    %269 = vmatprep.subr.bf16.mxu0 0
    %270 = vmatpush2.bf16.msra.mxu0 0
    %271 = vmatprep.subr.bf16.mxu0 0
    %272 = vmatpush2.bf16.msra.mxu0 0
    %273 = vmatprep.subr.bf16.mxu0 0
    %274 = vmatpush2.bf16.msra.mxu0 0
    %275 = vmatprep.subr.bf16.mxu0 0
    %276 = vmatpush2.bf16.msra.mxu0 0
    %277 = vmatprep.subr.bf16.mxu0 0
    %278 = vmatpush2.bf16.msra.mxu0 0
    %279 = vmatprep.subr.bf16.mxu0 0
    %280 = vmatpush2.bf16.msra.mxu0 0
    %281 = vmatprep.mubr.bf16.mxu0 0
    %282 = vmatmul.mubr.bf16.gmra.mxu0 %v243
    %v283 = vpop.f32.mrf.mxu0
    %v284 = vadd.f32 0.0, %v283
    %v285 = vpop.f32.mrf.mxu0
    %v286 = vpop.f32.mrf.mxu0
    %v287 = vpop.f32.mrf.mxu0
    %288 = vdwg.mxu0
    %v289 = vadd.f32 %v233, %v284
    %v290 = vld [vmem:[%s8] sm:$0x1]
    %v291 = vlaneseq
    %v292 = vshrl.u32 %v291, 7
    %v293 = vsub.s32 0, %v292
    %v294 = vrot.slane %v290, %v293
    %v295 = vadd.f32 %v289, %v294
    %v296 = vmax.f32 %v295, 0.0
    %v297 = vpack.c.bf16 %v296, %v296
    %v298 = vld [vmem:[#allocation10] sm:$0xf]
    %v299 = vld [vmem:[#allocation10 + $0x4] sm:$0xf]
    %v300 = vld [vmem:[#allocation10 + $0x8] sm:$0xf]
    %v301 = vld [vmem:[#allocation10 + $0xc] sm:$0xf]
    %v302 = vld [vmem:[#allocation10 + $0x10] sm:$0xf]
    %v303 = vld [vmem:[#allocation10 + $0x14] sm:$0xf]
    %v304 = vld [vmem:[#allocation10 + $0x18] sm:$0xf]
    %v305 = vld [vmem:[#allocation10 + $0x1c] sm:$0xf]
    %v306 = vld [vmem:[#allocation10 + $0x20] sm:$0xf]
    %v307 = vld [vmem:[#allocation10 + $0x24] sm:$0xf]
    %v308 = vld [vmem:[#allocation10 + $0x28] sm:$0xf]
    %v309 = vld [vmem:[#allocation10 + $0x2c] sm:$0xf]
    %v310 = vld [vmem:[#allocation10 + $0x30] sm:$0xf]
    %v311 = vld [vmem:[#allocation10 + $0x34] sm:$0xf]
    %v312 = vld [vmem:[#allocation10 + $0x38] sm:$0xf]
    %v313 = vld [vmem:[#allocation10 + $0x3c] sm:$0xf]
    %v314 = vld [vmem:[%s8 + $0x1] sm:$0x1]
    %v315 = vlaneseq
    %v316 = vshrl.u32 %v315, 7
    %v317 = vsub.s32 0, %v316
    %v318 = vrot.slane %v314, %v317
    %v335 = vunpack.c.l.b16 %v298
    %v336 = vunpack.c.l.b16 %v299
    %v337 = vunpack.c.l.b16 %v300
    %v338 = vunpack.c.l.b16 %v301
    %v339 = vunpack.c.l.b16 %v302
    %v340 = vunpack.c.l.b16 %v303
    %v341 = vunpack.c.l.b16 %v304
    %v342 = vunpack.c.l.b16 %v305
    %v343 = vunpack.c.l.b16 %v306
    %v344 = vunpack.c.l.b16 %v307
    %v345 = vunpack.c.l.b16 %v308
    %v346 = vunpack.c.l.b16 %v309
    %v347 = vunpack.c.l.b16 %v310
    %v348 = vunpack.c.l.b16 %v311
    %v349 = vunpack.c.l.b16 %v312
    %v350 = vunpack.c.l.b16 %v313
    %v351 = vpack.c.b16 %v336, %v335
    %v352 = vpack.c.b16 %v338, %v337
    %v353 = vpack.c.b16 %v340, %v339
    %v354 = vpack.c.b16 %v342, %v341
    %v355 = vpack.c.b16 %v344, %v343
    %v356 = vpack.c.b16 %v346, %v345
    %v357 = vpack.c.b16 %v348, %v347
    %v358 = vpack.c.b16 %v350, %v349
    %367 = vmatprep.subr.bf16.mxu0 0
    %368 = vmatpush1.bf16.msra.mxu0 %v358
    %369 = vmatprep.subr.bf16.mxu0 0
    %370 = vmatpush1.bf16.msra.mxu0 %v357
    %371 = vmatprep.subr.bf16.mxu0 0
    %372 = vmatpush1.bf16.msra.mxu0 %v356
    %373 = vmatprep.subr.bf16.mxu0 0
    %374 = vmatpush1.bf16.msra.mxu0 %v355
    %375 = vmatprep.subr.bf16.mxu0 0
    %376 = vmatpush1.bf16.msra.mxu0 %v354
    %377 = vmatprep.subr.bf16.mxu0 0
    %378 = vmatpush1.bf16.msra.mxu0 %v353
    %379 = vmatprep.subr.bf16.mxu0 0
    %380 = vmatpush1.bf16.msra.mxu0 %v352
    %381 = vmatprep.subr.bf16.mxu0 0
    %382 = vmatpush1.bf16.msra.mxu0 %v351
    %383 = vmatprep.subr.bf16.mxu0 0
    %384 = vmatpush2.bf16.msra.mxu0 0
    %385 = vmatprep.subr.bf16.mxu0 0
    %386 = vmatpush2.bf16.msra.mxu0 0
    %387 = vmatprep.subr.bf16.mxu0 0
    %388 = vmatpush2.bf16.msra.mxu0 0
    %389 = vmatprep.subr.bf16.mxu0 0
    %390 = vmatpush2.bf16.msra.mxu0 0
    %391 = vmatprep.subr.bf16.mxu0 0
    %392 = vmatpush2.bf16.msra.mxu0 0
    %393 = vmatprep.subr.bf16.mxu0 0
    %394 = vmatpush2.bf16.msra.mxu0 0
    %395 = vmatprep.subr.bf16.mxu0 0
    %396 = vmatpush2.bf16.msra.mxu0 0
    %397 = vmatprep.subr.bf16.mxu0 0
    %398 = vmatpush2.bf16.msra.mxu0 0
    %399 = vmatprep.mubr.bf16.mxu0 0
    %400 = vmatmul.mubr.bf16.gmra.mxu0 %v297
    %v401 = vpop.f32.mrf.mxu0
    %v402 = vadd.f32 %v318, %v401
    %v403 = vpop.f32.mrf.mxu0
    %v404 = vpop.f32.mrf.mxu0
    %v405 = vpop.f32.mrf.mxu0
    %406 = vdwg.mxu0
    %v407 = vmax.f32 %v402, 0.0
    %v408 = vpack.c.bf16 %v407, %v407
    %v409 = vld [vmem:[#allocation12] sm:$0xf]
    %v410 = vld [vmem:[#allocation12 + $0x4] sm:$0xf]
    %v411 = vld [vmem:[#allocation12 + $0x8] sm:$0xf]
    %v412 = vld [vmem:[#allocation12 + $0xc] sm:$0xf]
    %v413 = vld [vmem:[#allocation12 + $0x10] sm:$0xf]
    %v414 = vld [vmem:[#allocation12 + $0x14] sm:$0xf]
    %v415 = vld [vmem:[#allocation12 + $0x18] sm:$0xf]
    %v416 = vld [vmem:[#allocation12 + $0x1c] sm:$0xf]
    %v417 = vld [vmem:[#allocation12 + $0x20] sm:$0xf]
    %v418 = vld [vmem:[#allocation12 + $0x24] sm:$0xf]
    %v419 = vld [vmem:[#allocation12 + $0x28] sm:$0xf]
    %v420 = vld [vmem:[#allocation12 + $0x2c] sm:$0xf]
    %v421 = vld [vmem:[#allocation12 + $0x30] sm:$0xf]
    %v422 = vld [vmem:[#allocation12 + $0x34] sm:$0xf]
    %v423 = vld [vmem:[#allocation12 + $0x38] sm:$0xf]
    %v424 = vld [vmem:[#allocation12 + $0x3c] sm:$0xf]
    %v425 = vld [vmem:[%s8 + $0x2] sm:$0x1]
    %v426 = vlaneseq
    %v427 = vshrl.u32 %v426, 7
    %v428 = vsub.s32 0, %v427
    %v429 = vrot.slane %v425, %v428
    %v446 = vunpack.c.l.b16 %v409
    %v447 = vunpack.c.l.b16 %v410
    %v448 = vunpack.c.l.b16 %v411
    %v449 = vunpack.c.l.b16 %v412
    %v450 = vunpack.c.l.b16 %v413
    %v451 = vunpack.c.l.b16 %v414
    %v452 = vunpack.c.l.b16 %v415
    %v453 = vunpack.c.l.b16 %v416
    %v454 = vunpack.c.l.b16 %v417
    %v455 = vunpack.c.l.b16 %v418
    %v456 = vunpack.c.l.b16 %v419
    %v457 = vunpack.c.l.b16 %v420
    %v458 = vunpack.c.l.b16 %v421
    %v459 = vunpack.c.l.b16 %v422
    %v460 = vunpack.c.l.b16 %v423
    %v461 = vunpack.c.l.b16 %v424
    %v462 = vpack.c.b16 %v447, %v446
    %v463 = vpack.c.b16 %v449, %v448
    %v464 = vpack.c.b16 %v451, %v450
    %v465 = vpack.c.b16 %v453, %v452
    %v466 = vpack.c.b16 %v455, %v454
    %v467 = vpack.c.b16 %v457, %v456
    %v468 = vpack.c.b16 %v459, %v458
    %v469 = vpack.c.b16 %v461, %v460
    %478 = vmatprep.subr.bf16.mxu0 0
    %479 = vmatpush1.bf16.msra.mxu0 %v469
    %480 = vmatprep.subr.bf16.mxu0 0
    %481 = vmatpush1.bf16.msra.mxu0 %v468
    %482 = vmatprep.subr.bf16.mxu0 0
    %483 = vmatpush1.bf16.msra.mxu0 %v467
    %484 = vmatprep.subr.bf16.mxu0 0
    %485 = vmatpush1.bf16.msra.mxu0 %v466
    %486 = vmatprep.subr.bf16.mxu0 0
    %487 = vmatpush1.bf16.msra.mxu0 %v465
    %488 = vmatprep.subr.bf16.mxu0 0
    %489 = vmatpush1.bf16.msra.mxu0 %v464
    %490 = vmatprep.subr.bf16.mxu0 0
    %491 = vmatpush1.bf16.msra.mxu0 %v463
    %492 = vmatprep.subr.bf16.mxu0 0
    %493 = vmatpush1.bf16.msra.mxu0 %v462
    %494 = vmatprep.subr.bf16.mxu0 0
    %495 = vmatpush2.bf16.msra.mxu0 0
    %496 = vmatprep.subr.bf16.mxu0 0
    %497 = vmatpush2.bf16.msra.mxu0 0
    %498 = vmatprep.subr.bf16.mxu0 0
    %499 = vmatpush2.bf16.msra.mxu0 0
    %500 = vmatprep.subr.bf16.mxu0 0
    %501 = vmatpush2.bf16.msra.mxu0 0
    %502 = vmatprep.subr.bf16.mxu0 0
    %503 = vmatpush2.bf16.msra.mxu0 0
    %504 = vmatprep.subr.bf16.mxu0 0
    %505 = vmatpush2.bf16.msra.mxu0 0
    %506 = vmatprep.subr.bf16.mxu0 0
    %507 = vmatpush2.bf16.msra.mxu0 0
    %508 = vmatprep.subr.bf16.mxu0 0
    %509 = vmatpush2.bf16.msra.mxu0 0
    %510 = vmatprep.mubr.bf16.mxu0 0
    %511 = vmatmul.mubr.bf16.gmra.mxu0 %v408
    %v512 = vpop.f32.mrf.mxu0
    %v513 = vadd.f32 %v429, %v512
    %v514 = vpop.f32.mrf.mxu0
    %v515 = vpop.f32.mrf.mxu0
    %v516 = vpop.f32.mrf.mxu0
    %517 = vdwg.mxu0
    %v518 = vmul.f32 %v513, 0.5
    %v519 = vtanh.pop %v518
    %v520 = vmul.f32 %v519, 0.5
    %v521 = vadd.f32 %v520, 0.5
    %vm522 = vcmask 11264
    %523 = vst.msk [vmem:[%s9] sm:$0xf] %vm522, %v521
    // Predicated region
    $region66: #{tpu_custom_call.1} parent=1 // pred_check
      _
    $region67: #{tpu_custom_call.1} parent=1 // pred_check_branch
      %525 = sbr.rel (0) target = $region69
    $region68: #{tpu_custom_call.1} parent=1 // pred_region
      _
    $region69: #{tpu_custom_call.1} parent=1 // pred_fallthru
      _
    // Predicated region
    $region70: #{tpu_custom_call.1} parent=1 // pred_check
      _
    $region71: #{tpu_custom_call.1} parent=1 // pred_check_branch
      %527 = sbr.rel (0) target = $region73
    $region72: #{tpu_custom_call.1} parent=1 // pred_region
      _
    $region73: #{tpu_custom_call.1} parent=1 // pred_fallthru
      _
    %528 = vsyncpa [#allocation3], 1
    %529 = vsyncpa [#allocation5], 1
    %530 = vsyncpa [#allocation8], 1
    %531 = vsyncpa [#allocation11], 1

</llo_original>
